<compile_context>
chip_gen: v7x
topology: tpu7x:2x2x1
jax: 0.10.0
libtpu: 0.0.40
codegen_flags: <defaults>
</compile_context>

<pallas_src>
import functools

import jax
import jax.numpy as jnp
from jax import lax
from jax.experimental import pallas as pl
from jax.experimental.pallas import tpu as pltpu

# RBF.__init__: n_kernels=5, mul_factor=2.0 -> 2.0 ** (arange(5) - 2)
N_KERNELS = 5
MUL_FACTOR = 2.0
BANDWIDTH_MULTIPLIERS = tuple(
    float(MUL_FACTOR ** (k - N_KERNELS // 2)) for k in range(N_KERNELS)
)  # (0.25, 0.5, 1.0, 2.0, 4.0)
_MAX_MULT = BANDWIDTH_MULTIPLIERS[-1]  # 4.0

_NT = (((1,), (1,)), ((), ()))  # A · Bᵀ (no relayout of B)


def _kernel_sum(d, neg_inv, valid=None):
    """sum_k exp(-d/(bw*m_k)) summed over (masked) elements, via one exp."""
    t = jnp.exp(d * neg_inv)   # mult = 4.0
    t2 = t * t                 # mult = 2.0
    t4 = t2 * t2               # mult = 1.0
    t8 = t4 * t4               # mult = 0.5
    t16 = t8 * t8              # mult = 0.25
    k = t + t2 + t4 + t8 + t16
    if valid is not None:
        k = jnp.where(valid, k, jnp.zeros_like(k))
    return jnp.sum(k)


# --------------------------------------------------------------------------- #
# Monolithic single-block kernel (small / medium N: everything fits in VMEM).  #
# --------------------------------------------------------------------------- #
def _mmd_kernel_single(x_ref, y_ref, out_ref):
    x = x_ref[...].astype(jnp.float32)  # (N, D)
    y = y_ref[...].astype(jnp.float32)  # (N, D)
    n = x.shape[0]
    n_total = 2 * n

    # Fold the "2*" of (-2*G) into the RHS operand -> no per-element multiply.
    x2 = x + x
    y2 = y + y

    sx = jnp.sum(x * x, axis=-1, keepdims=True)  # (N, 1)
    sy = jnp.sum(y * y, axis=-1, keepdims=True)  # (N, 1)
    sx_t = sx.T                                  # (1, N)
    sy_t = sy.T                                  # (1, N)

    # Interleaved per-quadrant: each Gram is consumed into its distance matrix
    # right away (fewer simultaneously-live (N,N) buffers).
    d_xx = jnp.maximum(
        sx + sx_t - lax.dot_general(x, x2, _NT, preferred_element_type=jnp.float32), 0.0)
    d_xy = jnp.maximum(
        sx + sy_t - lax.dot_general(x, y2, _NT, preferred_element_type=jnp.float32), 0.0)
    d_yy = jnp.maximum(
        sy + sy_t - lax.dot_general(y, y2, _NT, preferred_element_type=jnp.float32), 0.0)

    # Full (2N,2N) L2 sum: sum(YX) == sum(XY) by symmetry.
    l2_total = jnp.sum(d_xx) + 2.0 * jnp.sum(d_xy) + jnp.sum(d_yy)
    bandwidth = l2_total / float(n_total * n_total - n_total)
    neg_inv = -1.0 / (bandwidth * _MAX_MULT)   # single scalar reciprocal

    s_xx = _kernel_sum(d_xx, neg_inv)
    s_xy = _kernel_sum(d_xy, neg_inv)
    s_yy = _kernel_sum(d_yy, neg_inv)

    # XX.mean() - 2*XY.mean() + YY.mean(), each quadrant is N x N.
    out_ref[0] = (s_xx - 2.0 * s_xy + s_yy) / float(n * n)


# --------------------------------------------------------------------------- #
# Tiled two-pass kernel (large N, or forced): grid = (pass, row_tile).         #
#   pass 0: accumulate L2 sum (bandwidth numerator) into SMEM scratch.         #
#   pass 1: recompute per-tile distances, accumulate the kernel sums.          #
# --------------------------------------------------------------------------- #
def _mmd_kernel_tiled(n_real, tm, x_ref, y_ref, out_ref, acc_ref):
    p = pl.program_id(0)  # 0 = bandwidth pass, 1 = kernel-sum pass
    i = pl.program_id(1)  # row-tile index
    n_pad = x_ref.shape[0]
    n_total = 2 * n_real

    @pl.when(jnp.logical_and(p == 0, i == 0))
    def _():
        acc_ref[0] = jnp.float32(0.0)   # L2 sum
        acc_ref[1] = jnp.float32(0.0)   # sum K_xx
        acc_ref[2] = jnp.float32(0.0)   # sum K_xy
        acc_ref[3] = jnp.float32(0.0)   # sum K_yy

    row0 = pl.multiple_of(i * tm, tm)

    x_all = x_ref[...].astype(jnp.float32)                 # (N_pad, D), resident
    y_all = y_ref[...].astype(jnp.float32)
    xt = x_ref[pl.ds(row0, tm), :].astype(jnp.float32)     # (TM, D)
    yt = y_ref[pl.ds(row0, tm), :].astype(jnp.float32)

    x2 = x_all + x_all
    y2 = y_all + y_all

    sx_t = jnp.sum(x_all * x_all, axis=-1, keepdims=True).T   # (1, N_pad)
    sy_t = jnp.sum(y_all * y_all, axis=-1, keepdims=True).T
    sxt = jnp.sum(xt * xt, axis=-1, keepdims=True)            # (TM, 1)
    syt = jnp.sum(yt * yt, axis=-1, keepdims=True)

    # Validity mask for padded rows/columns (pad rows are zeros, masked out).
    row_ids = lax.broadcasted_iota(jnp.int32, (tm, 1), 0) + row0
    col_ids = lax.broadcasted_iota(jnp.int32, (1, n_pad), 1)
    valid = jnp.logical_and(row_ids < n_real, col_ids < n_real)   # (TM, N_pad)

    d_xx = jnp.maximum(
        sxt + sx_t - lax.dot_general(xt, x2, _NT, preferred_element_type=jnp.float32), 0.0)
    d_xy = jnp.maximum(
        sxt + sy_t - lax.dot_general(xt, y2, _NT, preferred_element_type=jnp.float32), 0.0)
    d_yy = jnp.maximum(
        syt + sy_t - lax.dot_general(yt, y2, _NT, preferred_element_type=jnp.float32), 0.0)

    zero = jnp.zeros_like(d_xx)

    @pl.when(p == 0)
    def _():
        l2 = (jnp.sum(jnp.where(valid, d_xx, zero))
              + 2.0 * jnp.sum(jnp.where(valid, d_xy, zero))
              + jnp.sum(jnp.where(valid, d_yy, zero)))
        acc_ref[0] = acc_ref[0] + l2

    @pl.when(p == 1)
    def _():
        bandwidth = acc_ref[0] / float(n_total * n_total - n_total)
        neg_inv = -1.0 / (bandwidth * _MAX_MULT)
        acc_ref[1] = acc_ref[1] + _kernel_sum(d_xx, neg_inv, valid)
        acc_ref[2] = acc_ref[2] + _kernel_sum(d_xy, neg_inv, valid)
        acc_ref[3] = acc_ref[3] + _kernel_sum(d_yy, neg_inv, valid)

    @pl.when(jnp.logical_and(p == 1, i == pl.num_programs(1) - 1))
    def _():
        out_ref[0] = (acc_ref[1] - 2.0 * acc_ref[2] + acc_ref[3]) / float(n_real * n_real)


# --------------------------------------------------------------------------- #
# Wrapper                                                                      #
# --------------------------------------------------------------------------- #
def _vmem_budget_bytes() -> int:
    """~75% of physical per-core VMEM (generation aware), conservative fallback."""
    cap = None
    try:
        cap = getattr(pltpu.get_tpu_info(), "vmem_capacity_bytes", None)
    except Exception:
        cap = None
    if not cap:
        cap = 64 << 20  # v7x per-TC physical; safe lower bound elsewhere
    return int(cap) * 3 // 4


def _pick_row_tile(n: int, d: int, budget: int) -> int:
    n8 = ((n + 7) // 8) * 8
    base = 2 * n8 * d * 4 * 2 + (4 << 20)          # resident inputs + slack
    avail = max(budget - base, 4 << 20)
    tm = avail // (12 * n8 * 4)                    # ~12 live (TM, N_pad) f32 slabs
    return int(max(8, min(512, (tm // 8) * 8)))


def mmd_loss(x: jax.Array, y: jax.Array, *, row_tile: int | None = None) -> jax.Array:
    assert x.shape == y.shape and x.ndim == 2
    n, d = x.shape
    budget = _vmem_budget_bytes()
    itemsize = jnp.dtype(x.dtype).itemsize

    # Monolithic estimate: double-buffered inputs + ~6 live (N,N) f32 slabs.
    mono_needed = 2 * n * d * itemsize * 2 + 6 * n * n * 4 + (2 << 20)

    if row_tile is None and mono_needed <= budget:
        vmem_limit = int(min(budget, max(mono_needed, 32 << 20)))
        cost = pl.CostEstimate(
            flops=int(3 * 2 * n * n * d),
            transcendentals=int(3 * n * n),
            bytes_accessed=int(2 * n * d * itemsize + 4),
        )
        out = pl.pallas_call(
            _mmd_kernel_single,
            out_shape=jax.ShapeDtypeStruct((1,), jnp.float32),
            in_specs=[
                pl.BlockSpec(x.shape, lambda: (0, 0)),
                pl.BlockSpec(y.shape, lambda: (0, 0)),
            ],
            out_specs=pl.BlockSpec(memory_space=pltpu.MemorySpace.SMEM),
            compiler_params=pltpu.CompilerParams(vmem_limit_bytes=vmem_limit),
            cost_estimate=cost,
        )(x, y)
        return out[0]

    # ---------------- tiled two-pass path ----------------
    tm = row_tile if row_tile is not None else _pick_row_tile(n, d, budget)
    tm = max(8, (int(tm) // 8) * 8)
    n_pad = ((n + tm - 1) // tm) * tm
    if n_pad != n:
        pad = n_pad - n
        x_p = jnp.pad(x, ((0, pad), (0, 0)))
        y_p = jnp.pad(y, ((0, pad), (0, 0)))
    else:
        x_p, y_p = x, y

    n_tiles = n_pad // tm
    needed = 2 * n_pad * d * itemsize * 2 + 12 * tm * n_pad * 4 + (4 << 20)
    vmem_limit = int(min(budget, max(needed, 32 << 20)))
    cost = pl.CostEstimate(
        flops=int(2 * 3 * 2 * n_pad * n_pad * d),   # distances recomputed in pass 2
        transcendentals=int(3 * n_pad * n_pad),
        bytes_accessed=int(2 * n_pad * d * itemsize + 4),
    )

    out = pl.pallas_call(
        functools.partial(_mmd_kernel_tiled, n, tm),
        out_shape=jax.ShapeDtypeStruct((1,), jnp.float32),
        grid=(2, n_tiles),
        in_specs=[
            pl.BlockSpec((n_pad, d), lambda p, i: (0, 0)),   # X resident in VMEM
            pl.BlockSpec((n_pad, d), lambda p, i: (0, 0)),   # Y resident in VMEM
        ],
        out_specs=pl.BlockSpec((1,), lambda p, i: (0,),
                               memory_space=pltpu.MemorySpace.SMEM),
        scratch_shapes=[pltpu.SMEM((4,), jnp.float32)],
        compiler_params=pltpu.CompilerParams(
            dimension_semantics=("arbitrary", "arbitrary"),
            vmem_limit_bytes=vmem_limit,
        ),
        cost_estimate=cost,
    )(x_p, y_p)
    return out[0]


# --------------------------------------------------------------------------- #
# Pure-JAX reference mirroring the PyTorch module.                             #
# --------------------------------------------------------------------------- #
def _mmd_loss_ref(x, y):
    z = jnp.concatenate([x, y], axis=0).astype(jnp.float32)
    n = z.shape[0]
    sq = jnp.sum(z * z, axis=-1)
    d2 = jnp.maximum(sq[:, None] + sq[None, :] - 2.0 * z @ z.T, 0.0)
    bw = jnp.sum(d2) / (n * n - n)
    k = sum(jnp.exp(-d2 / (bw * m)) for m in BANDWIDTH_MULTIPLIERS)
    half = n // 2
    return (jnp.mean(k[:half, :half])
            - 2.0 * jnp.mean(k[:half, half:])
            + jnp.mean(k[half:, half:]))


if __name__ == "__main__":
    key = jax.random.PRNGKey(0)
    kx, ky = jax.random.split(key)

    # Small shapes consistent with the module: 8 samples each, 32 features.
    X = jax.random.normal(kx, (8, 32), dtype=jnp.float32)
    Y = jax.random.normal(ky, (8, 32), dtype=jnp.float32) + 0.5
    loss = jax.block_until_ready(mmd_loss(X, Y))               # monolithic path
    ref = jax.block_until_ready(_mmd_loss_ref(X, Y))
    assert jnp.allclose(loss, ref, atol=1e-4, rtol=1e-4), (loss, ref)

    # Exercise the tiled two-pass path (forced small row tile, N not divisible
    # by the tile -> padding + masking are covered).
    kx2, ky2 = jax.random.split(ky)
    X2 = jax.random.normal(kx2, (40, 32), dtype=jnp.float32)
    Y2 = jax.random.normal(ky2, (40, 32), dtype=jnp.float32) * 0.5 + 1.0
    loss2 = jax.block_until_ready(mmd_loss(X2, Y2, row_tile=16))
    ref2 = jax.block_until_ready(_mmd_loss_ref(X2, Y2))
    assert jnp.allclose(loss2, ref2, atol=1e-4, rtol=1e-4), (loss2, ref2)

    print("KERNEL_OK")
</pallas_src>

<mosaic_0001>
module attributes {stable_mosaic.version = 11 : i64} {
  func.func @_mmd_kernel_single(%arg0: memref<8x32xf32, #tpu.memory_space<vmem>>, %arg1: memref<8x32xf32, #tpu.memory_space<vmem>>, %arg2: memref<1xf32, #tpu.memory_space<smem>>) attributes {dimension_semantics = [], scalar_prefetch = 0 : i64, scratch_operands = 0 : i64, tpu.core_type = #tpu.core_type<tc>} {
    %c0 = arith.constant 0 : index
    %c0_0 = arith.constant 0 : index
    %0 = vector.load %arg0[%c0, %c0_0] : memref<8x32xf32, #tpu.memory_space<vmem>>, vector<8x32xf32>
    %c0_1 = arith.constant 0 : index
    %c0_2 = arith.constant 0 : index
    %1 = vector.load %arg1[%c0_1, %c0_2] : memref<8x32xf32, #tpu.memory_space<vmem>>, vector<8x32xf32>
    %2 = arith.addf %0, %0 : vector<8x32xf32>
    %3 = arith.addf %1, %1 : vector<8x32xf32>
    %4 = arith.mulf %0, %0 : vector<8x32xf32>
    %cst = arith.constant dense<0.000000e+00> : vector<8xf32>
    %5 = vector.multi_reduction <add>, %4, %cst [1] : vector<8x32xf32> to vector<8xf32>
    %6 = vector.shape_cast %5 : vector<8xf32> to vector<8x1xf32>
    %7 = arith.mulf %1, %1 : vector<8x32xf32>
    %cst_3 = arith.constant dense<0.000000e+00> : vector<8xf32>
    %8 = vector.multi_reduction <add>, %7, %cst_3 [1] : vector<8x32xf32> to vector<8xf32>
    %9 = vector.shape_cast %8 : vector<8xf32> to vector<8x1xf32>
    %10 = tpu.transpose %6, [1, 0] : vector<8x1xf32> -> vector<1x8xf32>
    %11 = tpu.transpose %9, [1, 0] : vector<8x1xf32> -> vector<1x8xf32>
    %12 = vector.broadcast %6 : vector<8x1xf32> to vector<8x8xf32>
    %13 = vector.broadcast %10 : vector<1x8xf32> to vector<8x8xf32>
    %14 = arith.addf %12, %13 : vector<8x8xf32>
    %cst_4 = arith.constant dense<0.000000e+00> : vector<8x8xf32>
    %15 = tpu.matmul %0, %2, %cst_4 {dimension_numbers = #tpu.dot_dimension_numbers<[1], [1], [0], [0], [0, 0, 1, 0], [], []>} : vector<8x32xf32>, vector<8x32xf32>, vector<8x8xf32> -> vector<8x8xf32>
    %16 = arith.subf %14, %15 : vector<8x8xf32>
    %cst_5 = arith.constant 0.000000e+00 : f32
    %17 = vector.broadcast %cst_5 : f32 to vector<8x8xf32>
    %18 = arith.maximumf %16, %17 : vector<8x8xf32>
    %19 = vector.broadcast %6 : vector<8x1xf32> to vector<8x8xf32>
    %20 = vector.broadcast %11 : vector<1x8xf32> to vector<8x8xf32>
    %21 = arith.addf %19, %20 : vector<8x8xf32>
    %cst_6 = arith.constant dense<0.000000e+00> : vector<8x8xf32>
    %22 = tpu.matmul %0, %3, %cst_6 {dimension_numbers = #tpu.dot_dimension_numbers<[1], [1], [0], [0], [0, 0, 1, 0], [], []>} : vector<8x32xf32>, vector<8x32xf32>, vector<8x8xf32> -> vector<8x8xf32>
    %23 = arith.subf %21, %22 : vector<8x8xf32>
    %cst_7 = arith.constant 0.000000e+00 : f32
    %24 = vector.broadcast %cst_7 : f32 to vector<8x8xf32>
    %25 = arith.maximumf %23, %24 : vector<8x8xf32>
    %26 = vector.broadcast %9 : vector<8x1xf32> to vector<8x8xf32>
    %27 = vector.broadcast %11 : vector<1x8xf32> to vector<8x8xf32>
    %28 = arith.addf %26, %27 : vector<8x8xf32>
    %cst_8 = arith.constant dense<0.000000e+00> : vector<8x8xf32>
    %29 = tpu.matmul %1, %3, %cst_8 {dimension_numbers = #tpu.dot_dimension_numbers<[1], [1], [0], [0], [0, 0, 1, 0], [], []>} : vector<8x32xf32>, vector<8x32xf32>, vector<8x8xf32> -> vector<8x8xf32>
    %30 = arith.subf %28, %29 : vector<8x8xf32>
    %cst_9 = arith.constant 0.000000e+00 : f32
    %31 = vector.broadcast %cst_9 : f32 to vector<8x8xf32>
    %32 = arith.maximumf %30, %31 : vector<8x8xf32>
    %33 = vector.shape_cast %18 : vector<8x8xf32> to vector<1x8x8xf32>
    %cst_10 = arith.constant dense<0.000000e+00> : vector<1xf32>
    %34 = vector.multi_reduction <add>, %33, %cst_10 [1, 2] : vector<1x8x8xf32> to vector<1xf32>
    %35 = vector.shape_cast %34 : vector<1xf32> to vector<1x1x1xf32>
    %36 = vector.extract %35[0, 0, 0] : f32 from vector<1x1x1xf32>
    %37 = vector.shape_cast %25 : vector<8x8xf32> to vector<1x8x8xf32>
    %cst_11 = arith.constant dense<0.000000e+00> : vector<1xf32>
    %38 = vector.multi_reduction <add>, %37, %cst_11 [1, 2] : vector<1x8x8xf32> to vector<1xf32>
    %39 = vector.shape_cast %38 : vector<1xf32> to vector<1x1x1xf32>
    %40 = vector.extract %39[0, 0, 0] : f32 from vector<1x1x1xf32>
    %cst_12 = arith.constant 2.000000e+00 : f32
    %41 = arith.mulf %cst_12, %40 : f32
    %42 = arith.addf %36, %41 : f32
    %43 = vector.shape_cast %32 : vector<8x8xf32> to vector<1x8x8xf32>
    %cst_13 = arith.constant dense<0.000000e+00> : vector<1xf32>
    %44 = vector.multi_reduction <add>, %43, %cst_13 [1, 2] : vector<1x8x8xf32> to vector<1xf32>
    %45 = vector.shape_cast %44 : vector<1xf32> to vector<1x1x1xf32>
    %46 = vector.extract %45[0, 0, 0] : f32 from vector<1x1x1xf32>
    %47 = arith.addf %42, %46 : f32
    %cst_14 = arith.constant 2.400000e+02 : f32
    %48 = arith.divf %47, %cst_14 : f32
    %cst_15 = arith.constant 4.000000e+00 : f32
    %49 = arith.mulf %48, %cst_15 : f32
    %cst_16 = arith.constant -1.000000e+00 : f32
    %50 = arith.divf %cst_16, %49 : f32
    %51 = vector.broadcast %50 : f32 to vector<8x8xf32>
    %52 = arith.mulf %18, %51 : vector<8x8xf32>
    %53 = math.exp %52 : vector<8x8xf32>
    %54 = arith.mulf %53, %53 : vector<8x8xf32>
    %55 = arith.mulf %54, %54 : vector<8x8xf32>
    %56 = arith.mulf %55, %55 : vector<8x8xf32>
    %57 = arith.mulf %56, %56 : vector<8x8xf32>
    %58 = arith.addf %53, %54 : vector<8x8xf32>
    %59 = arith.addf %58, %55 : vector<8x8xf32>
    %60 = arith.addf %59, %56 : vector<8x8xf32>
    %61 = arith.addf %60, %57 : vector<8x8xf32>
    %62 = vector.shape_cast %61 : vector<8x8xf32> to vector<1x8x8xf32>
    %cst_17 = arith.constant dense<0.000000e+00> : vector<1xf32>
    %63 = vector.multi_reduction <add>, %62, %cst_17 [1, 2] : vector<1x8x8xf32> to vector<1xf32>
    %64 = vector.shape_cast %63 : vector<1xf32> to vector<1x1x1xf32>
    %65 = vector.extract %64[0, 0, 0] : f32 from vector<1x1x1xf32>
    %66 = vector.broadcast %50 : f32 to vector<8x8xf32>
    %67 = arith.mulf %25, %66 : vector<8x8xf32>
    %68 = math.exp %67 : vector<8x8xf32>
    %69 = arith.mulf %68, %68 : vector<8x8xf32>
    %70 = arith.mulf %69, %69 : vector<8x8xf32>
    %71 = arith.mulf %70, %70 : vector<8x8xf32>
    %72 = arith.mulf %71, %71 : vector<8x8xf32>
    %73 = arith.addf %68, %69 : vector<8x8xf32>
    %74 = arith.addf %73, %70 : vector<8x8xf32>
    %75 = arith.addf %74, %71 : vector<8x8xf32>
    %76 = arith.addf %75, %72 : vector<8x8xf32>
    %77 = vector.shape_cast %76 : vector<8x8xf32> to vector<1x8x8xf32>
    %cst_18 = arith.constant dense<0.000000e+00> : vector<1xf32>
    %78 = vector.multi_reduction <add>, %77, %cst_18 [1, 2] : vector<1x8x8xf32> to vector<1xf32>
    %79 = vector.shape_cast %78 : vector<1xf32> to vector<1x1x1xf32>
    %80 = vector.extract %79[0, 0, 0] : f32 from vector<1x1x1xf32>
    %81 = vector.broadcast %50 : f32 to vector<8x8xf32>
    %82 = arith.mulf %32, %81 : vector<8x8xf32>
    %83 = math.exp %82 : vector<8x8xf32>
    %84 = arith.mulf %83, %83 : vector<8x8xf32>
    %85 = arith.mulf %84, %84 : vector<8x8xf32>
    %86 = arith.mulf %85, %85 : vector<8x8xf32>
    %87 = arith.mulf %86, %86 : vector<8x8xf32>
    %88 = arith.addf %83, %84 : vector<8x8xf32>
    %89 = arith.addf %88, %85 : vector<8x8xf32>
    %90 = arith.addf %89, %86 : vector<8x8xf32>
    %91 = arith.addf %90, %87 : vector<8x8xf32>
    %92 = vector.shape_cast %91 : vector<8x8xf32> to vector<1x8x8xf32>
    %cst_19 = arith.constant dense<0.000000e+00> : vector<1xf32>
    %93 = vector.multi_reduction <add>, %92, %cst_19 [1, 2] : vector<1x8x8xf32> to vector<1xf32>
    %94 = vector.shape_cast %93 : vector<1xf32> to vector<1x1x1xf32>
    %95 = vector.extract %94[0, 0, 0] : f32 from vector<1x1x1xf32>
    %cst_20 = arith.constant 2.000000e+00 : f32
    %96 = arith.mulf %cst_20, %80 : f32
    %97 = arith.subf %65, %96 : f32
    %98 = arith.addf %97, %95 : f32
    %cst_21 = arith.constant 6.400000e+01 : f32
    %99 = arith.divf %98, %cst_21 : f32
    %c0_22 = arith.constant 0 : index
    %100 = memref.load %arg2[%c0_22] : memref<1xf32, #tpu.memory_space<smem>>
    memref.store %99, %arg2[%c0_22] : memref<1xf32, #tpu.memory_space<smem>>
    return
  }
}

</mosaic_0001>

<llo_original>
// kernel: tpu_custom_call.1
$region0: #{tpu_custom_call.1}
  #allocation0 [shape = 'u32[]', space=smem, size = 0x4, offset = 0x4, fixed_abs, tag = 'smem constant byte address 0x4 - core index']
  #allocation1 [shape = 'u32[144,128]{1,0:T(1,128)}', space=vmem, size = 0x12000, scoped, tag = 'internal scratch']
  %s0 = inlined_call_operand.hbm [shape: f32[8,32], index: 0, kind: input, shape index: {}]
  %s1 = inlined_call_operand.hbm [shape: f32[8,32], index: 1, kind: input, shape index: {}]
  %s2 = inlined_call_operand.hbm [shape: f32[1], index: 2, kind: output, shape index: {}]
  %s3 = sld [smem:[#allocation0]]
  $region26: #{tpu_custom_call.1} parent=0
    _
  %s5 = ssub.s32 1, %s3
  %s6 = scalar_select 0, %s5, %s3
  $region1: #{tpu_custom_call.1} parent=0
    #allocation2 [shape = 'u8[4096]{0}', space=vmem, size = 0x1000, scoped, tag = 'input window, operand 0, single buffered']
    #allocation3 [shape = 's32[1]{0}', space=sflag, size = 0x4, scoped, tag = 'scoped memory for tpu_custom_call.1']
    #allocation4 [shape = 's32[1]{0}', space=sflag, size = 0x4, scoped, tag = 'scoped memory for tpu_custom_call.1']
    #allocation5 [shape = 'u8[4096]{0}', space=vmem, size = 0x1000, scoped, tag = 'input window, operand 1, single buffered']
    #allocation6 [shape = 's32[1]{0}', space=sflag, size = 0x4, scoped, tag = 'scoped memory for tpu_custom_call.1']
    #allocation7 [shape = 'u8[512]{0}', space=smem, size = 0x200, scoped, tag = 'output window, operand 0, single buffered']
    %7 = vsyncpa [#allocation3], 0
    %8 = vsyncpa [#allocation6], 0
    %9 = vsyncpa [#allocation4], 0
    // Predicated region
    $region2: #{tpu_custom_call.1} parent=1 // pred_check
      _
    $region3: #{tpu_custom_call.1} parent=1 // pred_check_branch
      %11 = sbr.rel (0) target = $region5
    $region4: #{tpu_custom_call.1} parent=1 // pred_region
      %s13 = ssub.s32 128, 128
      %14 = vsyncadd [#allocation3], %s13
      %s16 = sshll.u32 [#allocation2], 4
      %s17 = int_to_ptr.vmem [resolvable:$true] %s16
      %19 = dma.hbm_to_vmem [thread:$0]  %s0, 128, %s17, [#allocation3]
    $region5: #{tpu_custom_call.1} parent=1 // pred_fallthru
      _
    // Predicated region
    $region6: #{tpu_custom_call.1} parent=1 // pred_check
      _
    $region7: #{tpu_custom_call.1} parent=1 // pred_check_branch
      %21 = sbr.rel (0) target = $region9
    $region8: #{tpu_custom_call.1} parent=1 // pred_region
      %s23 = ssub.s32 128, 128
      %24 = vsyncadd [#allocation6], %s23
      %s26 = sshll.u32 [#allocation5], 4
      %s27 = int_to_ptr.vmem [resolvable:$true] %s26
      %29 = dma.hbm_to_vmem [thread:$0]  %s1, 128, %s27, [#allocation6]
    $region9: #{tpu_custom_call.1} parent=1 // pred_fallthru
      _
    // Predicated region
    $region10: #{tpu_custom_call.1} parent=1 // pred_check
      _
    $region11: #{tpu_custom_call.1} parent=1 // pred_check_branch
      %31 = sbr.rel (0) target = $region13
    $region12: #{tpu_custom_call.1} parent=1 // pred_region
      %32 = dma.done [#allocation3], 128
    $region13: #{tpu_custom_call.1} parent=1 // pred_fallthru
      _
    // Predicated region
    $region14: #{tpu_custom_call.1} parent=1 // pred_check
      _
    $region15: #{tpu_custom_call.1} parent=1 // pred_check_branch
      %34 = sbr.rel (0) target = $region17
    $region16: #{tpu_custom_call.1} parent=1 // pred_region
      %35 = dma.done [#allocation6], 128
    $region17: #{tpu_custom_call.1} parent=1 // pred_fallthru
      _
    %v36 = vld [vmem:[#allocation2] sm:$0xff]
    %v37 = vld [vmem:[#allocation5] sm:$0xff]
    %v38 = vadd.f32 %v36, %v36
    %v39 = vadd.f32 %v37, %v37
    %v40 = vmul.f32 %v36, %v36
    %vm41 = vcmask 261120
    %v42 = vsel %vm41, %v40, 0.0
    %43 = vadd.xlane.f32.xlu0 %v42
    %v44 = vpop.xlane.xlu0 %43
    %v45 = vmul.f32 %v37, %v37
    %v46 = vsel %vm41, %v45, 0.0
    %47 = vadd.xlane.f32.xlu0 %v46
    %v48 = vpop.xlane.xlu0 %47
    %49 = vxpose.xlu0.b32.start [1/16] %v44, 128
    %50 = vxpose.xlu0.b32.cont [2/16] 0.0, 128
    %51 = vxpose.xlu0.b32.cont [3/16] 0.0, 128
    %52 = vxpose.xlu0.b32.cont [4/16] 0.0, 128
    %53 = vxpose.xlu0.b32.cont [5/16] 0.0, 128
    %54 = vxpose.xlu0.b32.cont [6/16] 0.0, 128
    %55 = vxpose.xlu0.b32.cont [7/16] 0.0, 128
    %56 = vxpose.xlu0.b32.cont [8/16] 0.0, 128
    %57 = vxpose.xlu0.b32.cont [9/16] 0.0, 128
    %58 = vxpose.xlu0.b32.cont [10/16] 0.0, 128
    %59 = vxpose.xlu0.b32.cont [11/16] 0.0, 128
    %60 = vxpose.xlu0.b32.cont [12/16] 0.0, 128
    %61 = vxpose.xlu0.b32.cont [13/16] 0.0, 128
    %62 = vxpose.xlu0.b32.cont [14/16] 0.0, 128
    %63 = vxpose.xlu0.b32.cont [15/16] 0.0, 128
    %64 = vxpose.xlu0.b32.end [16/16] 0.0, 128
    %v65 = vpop.trf.xlu0
    %v66 = vpop.trf.xlu0
    %v67 = vpop.trf.xlu0
    %v68 = vpop.trf.xlu0
    %v69 = vpop.trf.xlu0
    %v70 = vpop.trf.xlu0
    %v71 = vpop.trf.xlu0
    %v72 = vpop.trf.xlu0
    %v73 = vpop.trf.xlu0
    %v74 = vpop.trf.xlu0
    %v75 = vpop.trf.xlu0
    %v76 = vpop.trf.xlu0
    %v77 = vpop.trf.xlu0
    %v78 = vpop.trf.xlu0
    %v79 = vpop.trf.xlu0
    %v80 = vpop.trf.xlu0
    %81 = vxpose.xlu0.b32.start [1/16] %v48, 128
    %82 = vxpose.xlu0.b32.cont [2/16] 0.0, 128
    %83 = vxpose.xlu0.b32.cont [3/16] 0.0, 128
    %84 = vxpose.xlu0.b32.cont [4/16] 0.0, 128
    %85 = vxpose.xlu0.b32.cont [5/16] 0.0, 128
    %86 = vxpose.xlu0.b32.cont [6/16] 0.0, 128
    %87 = vxpose.xlu0.b32.cont [7/16] 0.0, 128
    %88 = vxpose.xlu0.b32.cont [8/16] 0.0, 128
    %89 = vxpose.xlu0.b32.cont [9/16] 0.0, 128
    %90 = vxpose.xlu0.b32.cont [10/16] 0.0, 128
    %91 = vxpose.xlu0.b32.cont [11/16] 0.0, 128
    %92 = vxpose.xlu0.b32.cont [12/16] 0.0, 128
    %93 = vxpose.xlu0.b32.cont [13/16] 0.0, 128
    %94 = vxpose.xlu0.b32.cont [14/16] 0.0, 128
    %95 = vxpose.xlu0.b32.cont [15/16] 0.0, 128
    %96 = vxpose.xlu0.b32.end [16/16] 0.0, 128
    %v97 = vpop.trf.xlu0
    %v98 = vpop.trf.xlu0
    %v99 = vpop.trf.xlu0
    %v100 = vpop.trf.xlu0
    %v101 = vpop.trf.xlu0
    %v102 = vpop.trf.xlu0
    %v103 = vpop.trf.xlu0
    %v104 = vpop.trf.xlu0
    %v105 = vpop.trf.xlu0
    %v106 = vpop.trf.xlu0
    %v107 = vpop.trf.xlu0
    %v108 = vpop.trf.xlu0
    %v109 = vpop.trf.xlu0
    %v110 = vpop.trf.xlu0
    %v111 = vpop.trf.xlu0
    %v112 = vpop.trf.xlu0
    %v113 = vlaneseq
    %v114 = vshrl.u32 %v113, 7
    %v115 = vsub.s32 0, %v114
    %v116 = vrot.slane %v65, %v115
    %v117 = vadd.f32 %v44, %v116
    %v119 = vsel %vm41, %v36, 0
    %v122 = vsel %vm41, %v38, 0
    %124 = vmatprep.subr.mxu0 0.0
    %125 = vmatpush1.xpose.msra.mxu0 %v122
    %126 = vmatprep.subr.mxu0 0.0
    %127 = vmatpush1.xpose.msra.mxu0 0.0
    %128 = vmatprep.subr.mxu0 0.0
    %129 = vmatpush1.xpose.msra.mxu0 0.0
    %130 = vmatprep.subr.mxu0 0.0
    %131 = vmatpush1.xpose.msra.mxu0 0.0
    %132 = vmatprep.subr.mxu0 0.0
    %133 = vmatpush1.xpose.msra.mxu0 0.0
    %134 = vmatprep.subr.mxu0 0.0
    %135 = vmatpush1.xpose.msra.mxu0 0.0
    %136 = vmatprep.subr.mxu0 0.0
    %137 = vmatpush1.xpose.msra.mxu0 0.0
    %138 = vmatprep.subr.mxu0 0.0
    %139 = vmatpush1.xpose.msra.mxu0 0.0
    %140 = vmatprep.subr.mxu0 0.0
    %141 = vmatpush1.xpose.msra.mxu0 0.0
    %142 = vmatprep.subr.mxu0 0.0
    %143 = vmatpush1.xpose.msra.mxu0 0.0
    %144 = vmatprep.subr.mxu0 0.0
    %145 = vmatpush1.xpose.msra.mxu0 0.0
    %146 = vmatprep.subr.mxu0 0.0
    %147 = vmatpush1.xpose.msra.mxu0 0.0
    %148 = vmatprep.subr.mxu0 0.0
    %149 = vmatpush1.xpose.msra.mxu0 0.0
    %150 = vmatprep.subr.mxu0 0.0
    %151 = vmatpush1.xpose.msra.mxu0 0.0
    %152 = vmatprep.subr.mxu0 0.0
    %153 = vmatpush1.xpose.msra.mxu0 0.0
    %154 = vmatprep.subr.mxu0 0.0
    %155 = vmatpush1.xpose.msra.mxu0 0.0
    %156 = vmatprep.subr.mxu0 0.0
    %157 = vmatpush1.xpose.msra.mxu0 0.0
    %158 = vmatprep.subr.mxu0 0.0
    %159 = vmatpush1.xpose.msra.mxu0 0.0
    %160 = vmatprep.subr.mxu0 0.0
    %161 = vmatpush1.xpose.msra.mxu0 0.0
    %162 = vmatprep.subr.mxu0 0.0
    %163 = vmatpush1.xpose.msra.mxu0 0.0
    %164 = vmatprep.subr.mxu0 0.0
    %165 = vmatpush1.xpose.msra.mxu0 0.0
    %166 = vmatprep.subr.mxu0 0.0
    %167 = vmatpush1.xpose.msra.mxu0 0.0
    %168 = vmatprep.subr.mxu0 0.0
    %169 = vmatpush1.xpose.msra.mxu0 0.0
    %170 = vmatprep.subr.mxu0 0.0
    %171 = vmatpush1.xpose.msra.mxu0 0.0
    %172 = vmatprep.subr.mxu0 0.0
    %173 = vmatpush1.xpose.msra.mxu0 0.0
    %174 = vmatprep.subr.mxu0 0.0
    %175 = vmatpush1.xpose.msra.mxu0 0.0
    %176 = vmatprep.subr.mxu0 0.0
    %177 = vmatpush1.xpose.msra.mxu0 0.0
    %178 = vmatprep.subr.mxu0 0.0
    %179 = vmatpush1.xpose.msra.mxu0 0.0
    %180 = vmatprep.subr.mxu0 0.0
    %181 = vmatpush1.xpose.msra.mxu0 0.0
    %182 = vmatprep.subr.mxu0 0.0
    %183 = vmatpush1.xpose.msra.mxu0 0.0
    %184 = vmatprep.subr.mxu0 0.0
    %185 = vmatpush1.xpose.msra.mxu0 0.0
    %186 = vmatprep.subr.mxu0 0.0
    %187 = vmatpush1.xpose.msra.mxu0 0.0
    %188 = vmatprep.mubr.f32.mxu0 0.0
    %189 = vmatmul.mubr.f32.gmra.mrb[0].mxu0 %v119
    %v190 = vpop.f32.mrb[0].mxu0
    %v191 = vadd.f32 0.0, %v190
    %v192 = vpop.f32.mrb[0].mxu0
    %193 = vdwg.mxu0
    %v194 = vsub.f32 %v117, %v191
    %v195 = vmax.f32 %v194, 0.0
    %v196 = vlaneseq
    %v197 = vshrl.u32 %v196, 7
    %v198 = vsub.s32 0, %v197
    %v199 = vrot.slane %v97, %v198
    %v200 = vadd.f32 %v44, %v199
    %v202 = vsel %vm41, %v39, 0
    %204 = vmatprep.subr.mxu0 0.0
    %205 = vmatpush1.xpose.msra.mxu0 %v202
    %206 = vmatprep.subr.mxu0 0.0
    %207 = vmatpush1.xpose.msra.mxu0 0.0
    %208 = vmatprep.subr.mxu0 0.0
    %209 = vmatpush1.xpose.msra.mxu0 0.0
    %210 = vmatprep.subr.mxu0 0.0
    %211 = vmatpush1.xpose.msra.mxu0 0.0
    %212 = vmatprep.subr.mxu0 0.0
    %213 = vmatpush1.xpose.msra.mxu0 0.0
    %214 = vmatprep.subr.mxu0 0.0
    %215 = vmatpush1.xpose.msra.mxu0 0.0
    %216 = vmatprep.subr.mxu0 0.0
    %217 = vmatpush1.xpose.msra.mxu0 0.0
    %218 = vmatprep.subr.mxu0 0.0
    %219 = vmatpush1.xpose.msra.mxu0 0.0
    %220 = vmatprep.subr.mxu0 0.0
    %221 = vmatpush1.xpose.msra.mxu0 0.0
    %222 = vmatprep.subr.mxu0 0.0
    %223 = vmatpush1.xpose.msra.mxu0 0.0
    %224 = vmatprep.subr.mxu0 0.0
    %225 = vmatpush1.xpose.msra.mxu0 0.0
    %226 = vmatprep.subr.mxu0 0.0
    %227 = vmatpush1.xpose.msra.mxu0 0.0
    %228 = vmatprep.subr.mxu0 0.0
    %229 = vmatpush1.xpose.msra.mxu0 0.0
    %230 = vmatprep.subr.mxu0 0.0
    %231 = vmatpush1.xpose.msra.mxu0 0.0
    %232 = vmatprep.subr.mxu0 0.0
    %233 = vmatpush1.xpose.msra.mxu0 0.0
    %234 = vmatprep.subr.mxu0 0.0
    %235 = vmatpush1.xpose.msra.mxu0 0.0
    %236 = vmatprep.subr.mxu0 0.0
    %237 = vmatpush1.xpose.msra.mxu0 0.0
    %238 = vmatprep.subr.mxu0 0.0
    %239 = vmatpush1.xpose.msra.mxu0 0.0
    %240 = vmatprep.subr.mxu0 0.0
    %241 = vmatpush1.xpose.msra.mxu0 0.0
    %242 = vmatprep.subr.mxu0 0.0
    %243 = vmatpush1.xpose.msra.mxu0 0.0
    %244 = vmatprep.subr.mxu0 0.0
    %245 = vmatpush1.xpose.msra.mxu0 0.0
    %246 = vmatprep.subr.mxu0 0.0
    %247 = vmatpush1.xpose.msra.mxu0 0.0
    %248 = vmatprep.subr.mxu0 0.0
    %249 = vmatpush1.xpose.msra.mxu0 0.0
    %250 = vmatprep.subr.mxu0 0.0
    %251 = vmatpush1.xpose.msra.mxu0 0.0
    %252 = vmatprep.subr.mxu0 0.0
    %253 = vmatpush1.xpose.msra.mxu0 0.0
    %254 = vmatprep.subr.mxu0 0.0
    %255 = vmatpush1.xpose.msra.mxu0 0.0
    %256 = vmatprep.subr.mxu0 0.0
    %257 = vmatpush1.xpose.msra.mxu0 0.0
    %258 = vmatprep.subr.mxu0 0.0
    %259 = vmatpush1.xpose.msra.mxu0 0.0
    %260 = vmatprep.subr.mxu0 0.0
    %261 = vmatpush1.xpose.msra.mxu0 0.0
    %262 = vmatprep.subr.mxu0 0.0
    %263 = vmatpush1.xpose.msra.mxu0 0.0
    %264 = vmatprep.subr.mxu0 0.0
    %265 = vmatpush1.xpose.msra.mxu0 0.0
    %266 = vmatprep.subr.mxu0 0.0
    %267 = vmatpush1.xpose.msra.mxu0 0.0
    %268 = vmatprep.mubr.f32.mxu0 0.0
    %269 = vmatmul.mubr.f32.gmra.mrb[0].mxu0 %v119
    %v270 = vpop.f32.mrb[0].mxu0
    %v271 = vadd.f32 0.0, %v270
    %v272 = vpop.f32.mrb[0].mxu0
    %273 = vdwg.mxu0
    %v274 = vsub.f32 %v200, %v271
    %v275 = vmax.f32 %v274, 0.0
    %v276 = vadd.f32 %v48, %v199
    %v278 = vsel %vm41, %v37, 0
    %280 = vmatprep.subr.mxu0 0.0
    %281 = vmatpush1.xpose.msra.mxu0 %v202
    %282 = vmatprep.subr.mxu0 0.0
    %283 = vmatpush1.xpose.msra.mxu0 0.0
    %284 = vmatprep.subr.mxu0 0.0
    %285 = vmatpush1.xpose.msra.mxu0 0.0
    %286 = vmatprep.subr.mxu0 0.0
    %287 = vmatpush1.xpose.msra.mxu0 0.0
    %288 = vmatprep.subr.mxu0 0.0
    %289 = vmatpush1.xpose.msra.mxu0 0.0
    %290 = vmatprep.subr.mxu0 0.0
    %291 = vmatpush1.xpose.msra.mxu0 0.0
    %292 = vmatprep.subr.mxu0 0.0
    %293 = vmatpush1.xpose.msra.mxu0 0.0
    %294 = vmatprep.subr.mxu0 0.0
    %295 = vmatpush1.xpose.msra.mxu0 0.0
    %296 = vmatprep.subr.mxu0 0.0
    %297 = vmatpush1.xpose.msra.mxu0 0.0
    %298 = vmatprep.subr.mxu0 0.0
    %299 = vmatpush1.xpose.msra.mxu0 0.0
    %300 = vmatprep.subr.mxu0 0.0
    %301 = vmatpush1.xpose.msra.mxu0 0.0
    %302 = vmatprep.subr.mxu0 0.0
    %303 = vmatpush1.xpose.msra.mxu0 0.0
    %304 = vmatprep.subr.mxu0 0.0
    %305 = vmatpush1.xpose.msra.mxu0 0.0
    %306 = vmatprep.subr.mxu0 0.0
    %307 = vmatpush1.xpose.msra.mxu0 0.0
    %308 = vmatprep.subr.mxu0 0.0
    %309 = vmatpush1.xpose.msra.mxu0 0.0
    %310 = vmatprep.subr.mxu0 0.0
    %311 = vmatpush1.xpose.msra.mxu0 0.0
    %312 = vmatprep.subr.mxu0 0.0
    %313 = vmatpush1.xpose.msra.mxu0 0.0
    %314 = vmatprep.subr.mxu0 0.0
    %315 = vmatpush1.xpose.msra.mxu0 0.0
    %316 = vmatprep.subr.mxu0 0.0
    %317 = vmatpush1.xpose.msra.mxu0 0.0
    %318 = vmatprep.subr.mxu0 0.0
    %319 = vmatpush1.xpose.msra.mxu0 0.0
    %320 = vmatprep.subr.mxu0 0.0
    %321 = vmatpush1.xpose.msra.mxu0 0.0
    %322 = vmatprep.subr.mxu0 0.0
    %323 = vmatpush1.xpose.msra.mxu0 0.0
    %324 = vmatprep.subr.mxu0 0.0
    %325 = vmatpush1.xpose.msra.mxu0 0.0
    %326 = vmatprep.subr.mxu0 0.0
    %327 = vmatpush1.xpose.msra.mxu0 0.0
    %328 = vmatprep.subr.mxu0 0.0
    %329 = vmatpush1.xpose.msra.mxu0 0.0
    %330 = vmatprep.subr.mxu0 0.0
    %331 = vmatpush1.xpose.msra.mxu0 0.0
    %332 = vmatprep.subr.mxu0 0.0
    %333 = vmatpush1.xpose.msra.mxu0 0.0
    %334 = vmatprep.subr.mxu0 0.0
    %335 = vmatpush1.xpose.msra.mxu0 0.0
    %336 = vmatprep.subr.mxu0 0.0
    %337 = vmatpush1.xpose.msra.mxu0 0.0
    %338 = vmatprep.subr.mxu0 0.0
    %339 = vmatpush1.xpose.msra.mxu0 0.0
    %340 = vmatprep.subr.mxu0 0.0
    %341 = vmatpush1.xpose.msra.mxu0 0.0
    %342 = vmatprep.subr.mxu0 0.0
    %343 = vmatpush1.xpose.msra.mxu0 0.0
    %344 = vmatprep.mubr.f32.mxu0 0.0
    %345 = vmatmul.mubr.f32.gmra.mrb[0].mxu0 %v278
    %v346 = vpop.f32.mrb[0].mxu0
    %v347 = vadd.f32 0.0, %v346
    %v348 = vpop.f32.mrb[0].mxu0
    %349 = vdwg.mxu0
    %v350 = vsub.f32 %v276, %v347
    %v351 = vmax.f32 %v350, 0.0
    %vm352 = vcmask 64512
    %v353 = vsel %vm352, %v195, 0.0
    %354 = vadd.xlane.f32.xlu0 %v353
    %v355 = vpop.xlane.xlu0 %354
    %v356 = vrot.slane %v355, 4
    %v357 = vadd.f32 %v355, %v356
    %v358 = vrot.slane %v357, 2
    %v359 = vadd.f32 %v357, %v358
    %v360 = vrot.slane %v359, 1
    %v361 = vadd.f32 %v359, %v360
    %s362 = vtos %v361
    %v363 = vsel %vm352, %v275, 0.0
    %364 = vadd.xlane.f32.xlu0 %v363
    %v365 = vpop.xlane.xlu0 %364
    %v366 = vrot.slane %v365, 4
    %v367 = vadd.f32 %v365, %v366
    %v368 = vrot.slane %v367, 2
    %v369 = vadd.f32 %v367, %v368
    %v370 = vrot.slane %v369, 1
    %v371 = vadd.f32 %v369, %v370
    %s372 = vtos %v371
    %s373 = smul.f32 %s372, 2.0
    %s374 = sadd.f32 %s362, %s373
    %v375 = vsel %vm352, %v351, 0.0
    %376 = vadd.xlane.f32.xlu0 %v375
    %v377 = vpop.xlane.xlu0 %376
    %v378 = vrot.slane %v377, 4
    %v379 = vadd.f32 %v377, %v378
    %v380 = vrot.slane %v379, 2
    %v381 = vadd.f32 %v379, %v380
    %v382 = vrot.slane %v381, 1
    %v383 = vadd.f32 %v381, %v382
    %s384 = vtos %v383
    %s385 = sadd.f32 %s374, %s384
    %v386 = vrcp.pop 240.0
    %s387 = vtos %v386
    %s388 = smul.f32 %s385, %s387
    %s389 = smul.f32 %s388, 4.0
    %v390 = vstv %s389
    %v391 = vrcp.pop %v390
    %s392 = vtos %v391
    %s393 = smul.f32 -1.0, %s392
    %v394 = vstv %s393
    %v395 = vmul.f32 %v195, %v394
    %v396 = vmul.f32 %v395, 1.442695
    %v397 = vpow.pop %v396
    %v398 = vmul.f32 %v397, %v397
    %v399 = vmul.f32 %v398, %v398
    %v400 = vmul.f32 %v399, %v399
    %v401 = vmul.f32 %v400, %v400
    %v402 = vadd.f32 %v397, %v398
    %v403 = vadd.f32 %v402, %v399
    %v404 = vadd.f32 %v403, %v400
    %v405 = vadd.f32 %v404, %v401
    %v406 = vsel %vm352, %v405, 0.0
    %407 = vadd.xlane.f32.xlu0 %v406
    %v408 = vpop.xlane.xlu0 %407
    %v409 = vrot.slane %v408, 4
    %v410 = vadd.f32 %v408, %v409
    %v411 = vrot.slane %v410, 2
    %v412 = vadd.f32 %v410, %v411
    %v413 = vrot.slane %v412, 1
    %v414 = vadd.f32 %v412, %v413
    %s415 = vtos %v414
    %v416 = vmul.f32 %v275, %v394
    %v417 = vmul.f32 %v416, 1.442695
    %v418 = vpow.pop %v417
    %v419 = vmul.f32 %v418, %v418
    %v420 = vmul.f32 %v419, %v419
    %v421 = vmul.f32 %v420, %v420
    %v422 = vmul.f32 %v421, %v421
    %v423 = vadd.f32 %v418, %v419
    %v424 = vadd.f32 %v423, %v420
    %v425 = vadd.f32 %v424, %v421
    %v426 = vadd.f32 %v425, %v422
    %v427 = vsel %vm352, %v426, 0.0
    %428 = vadd.xlane.f32.xlu0 %v427
    %v429 = vpop.xlane.xlu0 %428
    %v430 = vrot.slane %v429, 4
    %v431 = vadd.f32 %v429, %v430
    %v432 = vrot.slane %v431, 2
    %v433 = vadd.f32 %v431, %v432
    %v434 = vrot.slane %v433, 1
    %v435 = vadd.f32 %v433, %v434
    %s436 = vtos %v435
    %v437 = vmul.f32 %v351, %v394
    %v438 = vmul.f32 %v437, 1.442695
    %v439 = vpow.pop %v438
    %v440 = vmul.f32 %v439, %v439
    %v441 = vmul.f32 %v440, %v440
    %v442 = vmul.f32 %v441, %v441
    %v443 = vmul.f32 %v442, %v442
    %v444 = vadd.f32 %v439, %v440
    %v445 = vadd.f32 %v444, %v441
    %v446 = vadd.f32 %v445, %v442
    %v447 = vadd.f32 %v446, %v443
    %v448 = vsel %vm352, %v447, 0.0
    %449 = vadd.xlane.f32.xlu0 %v448
    %v450 = vpop.xlane.xlu0 %449
    %v451 = vrot.slane %v450, 4
    %v452 = vadd.f32 %v450, %v451
    %v453 = vrot.slane %v452, 2
    %v454 = vadd.f32 %v452, %v453
    %v455 = vrot.slane %v454, 1
    %v456 = vadd.f32 %v454, %v455
    %s457 = vtos %v456
    %s458 = smul.f32 %s436, 2.0
    %s459 = ssub.f32 %s415, %s458
    %s460 = sadd.f32 %s459, %s457
    %v461 = vrcp.pop 64.0
    %s462 = vtos %v461
    %s463 = smul.f32 %s460, %s462
    %s464 = scalar_lea.smem [#allocation7], 0
    %465 = sst [smem:[%s464]] %s463
    // Predicated region
    $region18: #{tpu_custom_call.1} parent=1 // pred_check
      _
    $region19: #{tpu_custom_call.1} parent=1 // pred_check_branch
      %467 = sbr.rel (0) target = $region21
    $region20: #{tpu_custom_call.1} parent=1 // pred_region
      %s469 = ssub.s32 16, 16
      %470 = vsyncadd [#allocation4], %s469
      %473 = dma.smem_to_hbm [#allocation7], 16, %s2, [#allocation4]
    $region21: #{tpu_custom_call.1} parent=1 // pred_fallthru
      _
    // Predicated region
    $region22: #{tpu_custom_call.1} parent=1 // pred_check
      _
    $region23: #{tpu_custom_call.1} parent=1 // pred_check_branch
      %475 = sbr.rel (0) target = $region25
    $region24: #{tpu_custom_call.1} parent=1 // pred_region
      %476 = dma.done [#allocation4], 16
    $region25: #{tpu_custom_call.1} parent=1 // pred_fallthru
      _
    %477 = sfence
    %478 = vsyncpa [#allocation3], 1
    %479 = vsyncpa [#allocation6], 1
    %480 = vsyncpa [#allocation4], 1

</llo_original>
